<compile_context>
chip_gen: v6e
topology: v6e:2x2x1
jax: 0.10.0
libtpu: 0.0.40
codegen_flags: <defaults>
</compile_context>

<pallas_src>
import jax
import jax.numpy as jnp
from jax.experimental import pallas as pl
from jax.experimental.pallas import tpu as pltpu

N_STATE = 8      # n_state
N_ACTION = 4     # n_action
H1, H2, H3 = 64, 256, 64

# Lane-padded sizes (multiples of 128 where the true size is smaller).
IN_PAD = 128
H1_PAD = 128
H2_PAD = 256
H3_PAD = 128
OUT_PAD = 128


def mlp_kernel(x_ref, w1_ref, b1_ref, w2_ref, b2_ref,
               w3_ref, b3_ref, w4_ref, b4_ref, out_ref):
    x = x_ref[...]

    # linear1 + ReLU
    h = jnp.dot(x, w1_ref[...], preferred_element_type=jnp.float32) + b1_ref[...]
    h = jnp.maximum(h, 0.0)

    # TODO(synk): Dropout(p=0.5) is identity in eval mode; training-mode dropout
    # (pltpu.prng_seed + prng_random_bits mask, 2x scale) is intentionally not emitted.

    # linear2 + ReLU
    h = jnp.dot(h, w2_ref[...], preferred_element_type=jnp.float32) + b2_ref[...]
    h = jnp.maximum(h, 0.0)

    # linear3 + ReLU
    h = jnp.dot(h, w3_ref[...], preferred_element_type=jnp.float32) + b3_ref[...]
    h = jnp.maximum(h, 0.0)

    # linear4 (q_values, no activation); out is lane-dense (128 wide).
    q = jnp.dot(h, w4_ref[...], preferred_element_type=jnp.float32) + b4_ref[...]
    out_ref[...] = q.astype(out_ref.dtype)


def _round_up(n, m):
    return pl.cdiv(n, m) * m


def _pad2(a, shape):
    """Zero-pad a 2-D array up to `shape` (exact math is preserved)."""
    out = jnp.zeros(shape, a.dtype)
    return out.at[: a.shape[0], : a.shape[1]].set(a)


def pad_params(params):
    """One-time padding of logical params to lane-aligned storage."""
    w1, b1, w2, b2, w3, b3, w4, b4 = params
    return (
        _pad2(w1, (IN_PAD, H1_PAD)), _pad2(b1, (1, H1_PAD)),
        _pad2(w2, (H1_PAD, H2_PAD)), _pad2(b2, (1, H2_PAD)),
        _pad2(w3, (H2_PAD, H3_PAD)), _pad2(b3, (1, H3_PAD)),
        _pad2(w4, (H3_PAD, OUT_PAD)), _pad2(b4, (1, OUT_PAD)),
    )


def net_forward(x, padded_params):
    """x: (B, N_STATE) f32.  padded_params: output of pad_params()."""
    w1, b1, w2, b2, w3, b3, w4, b4 = padded_params
    B = x.shape[0]

    # Batch tile: at least the 8-row f32 sublane height, at most 256 rows.
    TB = int(min(256, _round_up(B, 8)))
    B_pad = int(_round_up(B, TB))
    grid = (B_pad // TB,)

    # Pad the batch and the feature dim (to 128 lanes) with zeros.
    x_pad = jnp.zeros((B_pad, IN_PAD), jnp.float32).at[:B, :N_STATE].set(x)

    def resident(shape):
        # Same block every grid step -> stays VMEM-resident, no re-DMA.
        return pl.BlockSpec(shape, lambda i: (0, 0))

    out = pl.pallas_call(
        mlp_kernel,
        out_shape=jax.ShapeDtypeStruct((B_pad, OUT_PAD), jnp.float32),
        grid=grid,
        in_specs=[
            pl.BlockSpec((TB, IN_PAD), lambda i: (i, 0)),   # x: tiled over batch
            resident((IN_PAD, H1_PAD)), resident((1, H1_PAD)),
            resident((H1_PAD, H2_PAD)), resident((1, H2_PAD)),
            resident((H2_PAD, H3_PAD)), resident((1, H3_PAD)),
            resident((H3_PAD, OUT_PAD)), resident((1, OUT_PAD)),
        ],
        out_specs=pl.BlockSpec((TB, OUT_PAD), lambda i: (i, 0)),
        compiler_params=pltpu.CompilerParams(
            dimension_semantics=("parallel",)),   # lets v7x split batch across 2 TCs
    )(x_pad, w1, b1, w2, b2, w3, b3, w4, b4)

    # Slice back to the logical shapes.
    return out[:B, :N_ACTION]


def init_params(key):
    """Logical (unpadded) params matching the PyTorch module's init."""
    ks = jax.random.split(key, 8)

    def linear(kw, kb, fan_in, fan_out):
        # weight.data.normal_(0, 0.1) as in the PyTorch module
        w = 0.1 * jax.random.normal(kw, (fan_in, fan_out), dtype=jnp.float32)
        # bias keeps PyTorch default init: U(-1/sqrt(fan_in), 1/sqrt(fan_in))
        bound = 1.0 / jnp.sqrt(jnp.float32(fan_in))
        b = jax.random.uniform(kb, (1, fan_out), dtype=jnp.float32,
                               minval=-bound, maxval=bound)
        return w, b

    w1, b1 = linear(ks[0], ks[1], N_STATE, H1)
    w2, b2 = linear(ks[2], ks[3], H1, H2)
    w3, b3 = linear(ks[4], ks[5], H2, H3)
    w4, b4 = linear(ks[6], ks[7], H3, N_ACTION)
    return (w1, b1, w2, b2, w3, b3, w4, b4)


def _reference(x, params):
    w1, b1, w2, b2, w3, b3, w4, b4 = params
    h = jnp.maximum(x @ w1 + b1, 0.0)
    h = jnp.maximum(h @ w2 + b2, 0.0)
    h = jnp.maximum(h @ w3 + b3, 0.0)
    return h @ w4 + b4


if __name__ == "__main__":
    key = jax.random.PRNGKey(0)
    kx, kx2, kp = jax.random.split(key, 3)
    params = init_params(kp)
    padded = pad_params(params)

    # Small-batch path (batch padded 2 -> 8 rows, single grid step).
    x_small = jax.random.normal(kx, (2, N_STATE), dtype=jnp.float32)
    q_small = net_forward(x_small, padded)
    jax.block_until_ready(q_small)
    assert q_small.shape == (2, N_ACTION)
    assert jnp.allclose(q_small, _reference(x_small, params), atol=1e-5, rtol=1e-5)

    # Larger batch exercises the multi-step batch grid (TB=256, grid=2).
    x_big = jax.random.normal(kx2, (300, N_STATE), dtype=jnp.float32)
    q_big = net_forward(x_big, padded)
    jax.block_until_ready(q_big)
    assert q_big.shape == (300, N_ACTION)
    assert jnp.allclose(q_big, _reference(x_big, params), atol=1e-4, rtol=1e-4)

    print("KERNEL_OK")
</pallas_src>

<mosaic_0001>
module attributes {stable_mosaic.version = 11 : i64} {
  func.func @mlp_kernel(%arg0: i32, %arg1: memref<8x128xf32, #tpu.memory_space<vmem>>, %arg2: memref<128x128xf32, #tpu.memory_space<vmem>>, %arg3: memref<1x128xf32, #tpu.memory_space<vmem>>, %arg4: memref<128x256xf32, #tpu.memory_space<vmem>>, %arg5: memref<1x256xf32, #tpu.memory_space<vmem>>, %arg6: memref<256x128xf32, #tpu.memory_space<vmem>>, %arg7: memref<1x128xf32, #tpu.memory_space<vmem>>, %arg8: memref<128x128xf32, #tpu.memory_space<vmem>>, %arg9: memref<1x128xf32, #tpu.memory_space<vmem>>, %arg10: memref<8x128xf32, #tpu.memory_space<vmem>>) attributes {dimension_semantics = [#tpu.dimension_semantics<parallel>], iteration_bounds = array<i64: 1>, scalar_prefetch = 0 : i64, scratch_operands = 0 : i64, tpu.core_type = #tpu.core_type<tc>, window_params = [{transform_indices = @transform_0, window_bounds = array<i64: 8, 128>}, {pipeline_mode = #tpu.pipeline_mode<synchronous>, transform_indices = @transform_1, window_bounds = array<i64: 128, 128>}, {pipeline_mode = #tpu.pipeline_mode<synchronous>, transform_indices = @transform_2, window_bounds = array<i64: 1, 128>}, {pipeline_mode = #tpu.pipeline_mode<synchronous>, transform_indices = @transform_3, window_bounds = array<i64: 128, 256>}, {pipeline_mode = #tpu.pipeline_mode<synchronous>, transform_indices = @transform_4, window_bounds = array<i64: 1, 256>}, {pipeline_mode = #tpu.pipeline_mode<synchronous>, transform_indices = @transform_5, window_bounds = array<i64: 256, 128>}, {pipeline_mode = #tpu.pipeline_mode<synchronous>, transform_indices = @transform_6, window_bounds = array<i64: 1, 128>}, {pipeline_mode = #tpu.pipeline_mode<synchronous>, transform_indices = @transform_7, window_bounds = array<i64: 128, 128>}, {pipeline_mode = #tpu.pipeline_mode<synchronous>, transform_indices = @transform_8, window_bounds = array<i64: 1, 128>}, {transform_indices = @transform_9, window_bounds = array<i64: 8, 128>}]} {
    %c0 = arith.constant 0 : index
    %c0_0 = arith.constant 0 : index
    %0 = vector.load %arg1[%c0, %c0_0] : memref<8x128xf32, #tpu.memory_space<vmem>>, vector<8x128xf32>
    %c0_1 = arith.constant 0 : index
    %c0_2 = arith.constant 0 : index
    %1 = vector.load %arg2[%c0_1, %c0_2] : memref<128x128xf32, #tpu.memory_space<vmem>>, vector<128x128xf32>
    %cst = arith.constant dense<0.000000e+00> : vector<8x128xf32>
    %2 = tpu.matmul %0, %1, %cst {dimension_numbers = #tpu.dot_dimension_numbers<[1], [0], [0], [1], [0, 0, 1, 1], [], []>} : vector<8x128xf32>, vector<128x128xf32>, vector<8x128xf32> -> vector<8x128xf32>
    %c0_3 = arith.constant 0 : index
    %c0_4 = arith.constant 0 : index
    %3 = vector.load %arg3[%c0_3, %c0_4] : memref<1x128xf32, #tpu.memory_space<vmem>>, vector<1x128xf32>
    %4 = vector.broadcast %3 : vector<1x128xf32> to vector<8x128xf32>
    %5 = arith.addf %2, %4 : vector<8x128xf32>
    %cst_5 = arith.constant 0.000000e+00 : f32
    %6 = vector.broadcast %cst_5 : f32 to vector<8x128xf32>
    %7 = arith.maximumf %5, %6 : vector<8x128xf32>
    %c0_6 = arith.constant 0 : index
    %c0_7 = arith.constant 0 : index
    %8 = vector.load %arg4[%c0_6, %c0_7] : memref<128x256xf32, #tpu.memory_space<vmem>>, vector<128x256xf32>
    %cst_8 = arith.constant dense<0.000000e+00> : vector<8x256xf32>
    %9 = tpu.matmul %7, %8, %cst_8 {dimension_numbers = #tpu.dot_dimension_numbers<[1], [0], [0], [1], [0, 0, 1, 1], [], []>} : vector<8x128xf32>, vector<128x256xf32>, vector<8x256xf32> -> vector<8x256xf32>
    %c0_9 = arith.constant 0 : index
    %c0_10 = arith.constant 0 : index
    %10 = vector.load %arg5[%c0_9, %c0_10] : memref<1x256xf32, #tpu.memory_space<vmem>>, vector<1x256xf32>
    %11 = vector.broadcast %10 : vector<1x256xf32> to vector<8x256xf32>
    %12 = arith.addf %9, %11 : vector<8x256xf32>
    %cst_11 = arith.constant 0.000000e+00 : f32
    %13 = vector.broadcast %cst_11 : f32 to vector<8x256xf32>
    %14 = arith.maximumf %12, %13 : vector<8x256xf32>
    %c0_12 = arith.constant 0 : index
    %c0_13 = arith.constant 0 : index
    %15 = vector.load %arg6[%c0_12, %c0_13] : memref<256x128xf32, #tpu.memory_space<vmem>>, vector<256x128xf32>
    %cst_14 = arith.constant dense<0.000000e+00> : vector<8x128xf32>
    %16 = tpu.matmul %14, %15, %cst_14 {dimension_numbers = #tpu.dot_dimension_numbers<[1], [0], [0], [1], [0, 0, 1, 1], [], []>} : vector<8x256xf32>, vector<256x128xf32>, vector<8x128xf32> -> vector<8x128xf32>
    %c0_15 = arith.constant 0 : index
    %c0_16 = arith.constant 0 : index
    %17 = vector.load %arg7[%c0_15, %c0_16] : memref<1x128xf32, #tpu.memory_space<vmem>>, vector<1x128xf32>
    %18 = vector.broadcast %17 : vector<1x128xf32> to vector<8x128xf32>
    %19 = arith.addf %16, %18 : vector<8x128xf32>
    %cst_17 = arith.constant 0.000000e+00 : f32
    %20 = vector.broadcast %cst_17 : f32 to vector<8x128xf32>
    %21 = arith.maximumf %19, %20 : vector<8x128xf32>
    %c0_18 = arith.constant 0 : index
    %c0_19 = arith.constant 0 : index
    %22 = vector.load %arg8[%c0_18, %c0_19] : memref<128x128xf32, #tpu.memory_space<vmem>>, vector<128x128xf32>
    %cst_20 = arith.constant dense<0.000000e+00> : vector<8x128xf32>
    %23 = tpu.matmul %21, %22, %cst_20 {dimension_numbers = #tpu.dot_dimension_numbers<[1], [0], [0], [1], [0, 0, 1, 1], [], []>} : vector<8x128xf32>, vector<128x128xf32>, vector<8x128xf32> -> vector<8x128xf32>
    %c0_21 = arith.constant 0 : index
    %c0_22 = arith.constant 0 : index
    %24 = vector.load %arg9[%c0_21, %c0_22] : memref<1x128xf32, #tpu.memory_space<vmem>>, vector<1x128xf32>
    %25 = vector.broadcast %24 : vector<1x128xf32> to vector<8x128xf32>
    %26 = arith.addf %23, %25 : vector<8x128xf32>
    %c0_23 = arith.constant 0 : index
    %c0_24 = arith.constant 0 : index
    %27 = vector.load %arg10[%c0_23, %c0_24] : memref<8x128xf32, #tpu.memory_space<vmem>>, vector<8x128xf32>
    tpu.vector_store %arg10[%c0_23, %c0_24], %26 {strides = array<i32>} : memref<8x128xf32, #tpu.memory_space<vmem>>, vector<8x128xf32>,
    return
  }
  func.func @transform_0(%arg0: i32) -> (i32, i32) {
    %c0_i32 = arith.constant 0 : i32
    %c0_i32_0 = arith.constant 0 : i32
    return %arg0, %c0_i32 : i32, i32
  }
  func.func @transform_1(%arg0: i32) -> (i32, i32) {
    %c0_i32 = arith.constant 0 : i32
    %c0_i32_0 = arith.constant 0 : i32
    %c0_i32_1 = arith.constant 0 : i32
    return %c0_i32, %c0_i32_0 : i32, i32
  }
  func.func @transform_2(%arg0: i32) -> (i32, i32) {
    %c0_i32 = arith.constant 0 : i32
    %c0_i32_0 = arith.constant 0 : i32
    %c0_i32_1 = arith.constant 0 : i32
    return %c0_i32, %c0_i32_0 : i32, i32
  }
  func.func @transform_3(%arg0: i32) -> (i32, i32) {
    %c0_i32 = arith.constant 0 : i32
    %c0_i32_0 = arith.constant 0 : i32
    %c0_i32_1 = arith.constant 0 : i32
    return %c0_i32, %c0_i32_0 : i32, i32
  }
  func.func @transform_4(%arg0: i32) -> (i32, i32) {
    %c0_i32 = arith.constant 0 : i32
    %c0_i32_0 = arith.constant 0 : i32
    %c0_i32_1 = arith.constant 0 : i32
    return %c0_i32, %c0_i32_0 : i32, i32
  }
  func.func @transform_5(%arg0: i32) -> (i32, i32) {
    %c0_i32 = arith.constant 0 : i32
    %c0_i32_0 = arith.constant 0 : i32
    %c0_i32_1 = arith.constant 0 : i32
    return %c0_i32, %c0_i32_0 : i32, i32
  }
  func.func @transform_6(%arg0: i32) -> (i32, i32) {
    %c0_i32 = arith.constant 0 : i32
    %c0_i32_0 = arith.constant 0 : i32
    %c0_i32_1 = arith.constant 0 : i32
    return %c0_i32, %c0_i32_0 : i32, i32
  }
  func.func @transform_7(%arg0: i32) -> (i32, i32) {
    %c0_i32 = arith.constant 0 : i32
    %c0_i32_0 = arith.constant 0 : i32
    %c0_i32_1 = arith.constant 0 : i32
    return %c0_i32, %c0_i32_0 : i32, i32
  }
  func.func @transform_8(%arg0: i32) -> (i32, i32) {
    %c0_i32 = arith.constant 0 : i32
    %c0_i32_0 = arith.constant 0 : i32
    %c0_i32_1 = arith.constant 0 : i32
    return %c0_i32, %c0_i32_0 : i32, i32
  }
  func.func @transform_9(%arg0: i32) -> (i32, i32) {
    %c0_i32 = arith.constant 0 : i32
    %c0_i32_0 = arith.constant 0 : i32
    return %arg0, %c0_i32 : i32, i32
  }
}

</mosaic_0001>

<llo_original>
// kernel: tpu_custom_call.1
$region0: #{tpu_custom_call.1}
  #allocation0 [shape = 'u32[]', space=smem, size = 0x4, offset = 0x4, fixed_abs, tag = 'smem constant byte address 0x4 - core index']
  #allocation1 [shape = 'u32[144,128]{1,0:T(1,128)}', space=vmem, size = 0x12000, scoped, tag = 'internal scratch']
  %s0 = inlined_call_operand.hbm [shape: f32[8,128], index: 0, kind: input, shape index: {}]
  %s1 = inlined_call_operand.hbm [shape: f32[128,128], index: 1, kind: input, shape index: {}]
  %s2 = inlined_call_operand.vmem [shape: f32[1,128], index: 2, kind: input, shape index: {}]
  %s3 = inlined_call_operand.hbm [shape: f32[128,256], index: 3, kind: input, shape index: {}]
  %s4 = inlined_call_operand.vmem [shape: f32[1,256], index: 4, kind: input, shape index: {}]
  %s5 = inlined_call_operand.hbm [shape: f32[256,128], index: 5, kind: input, shape index: {}]
  %s6 = inlined_call_operand.vmem [shape: f32[1,128], index: 6, kind: input, shape index: {}]
  %s7 = inlined_call_operand.hbm [shape: f32[128,128], index: 7, kind: input, shape index: {}]
  %s8 = inlined_call_operand.vmem [shape: f32[1,128], index: 8, kind: input, shape index: {}]
  %s9 = inlined_call_operand.hbm [shape: f32[8,128], index: 9, kind: output, shape index: {}]
  %s10 = sld [smem:[#allocation0]]
  $region66: #{tpu_custom_call.1} parent=0
    _
  %s12 = ssub.s32 1, %s10
  %s13 = scalar_select 0, %s12, %s10
  $region1: #{tpu_custom_call.1} parent=0
    #allocation2 [shape = 'u8[4096]{0}', space=vmem, size = 0x1000, scoped, tag = 'input window, operand 0, single buffered']
    #allocation3 [shape = 's32[1]{0}', space=sflag, size = 0x4, scoped, tag = 'scoped memory for tpu_custom_call.1']
    #allocation4 [shape = 's32[1]{0}', space=sflag, size = 0x4, scoped, tag = 'scoped memory for tpu_custom_call.1']
    #allocation5 [shape = 'u8[65536]{0}', space=vmem, size = 0x10000, scoped, tag = 'input window, operand 1, single buffered']
    #allocation6 [shape = 's32[1]{0}', space=sflag, size = 0x4, scoped, tag = 'scoped memory for tpu_custom_call.1']
    #allocation7 [shape = 'u8[131072]{0}', space=vmem, size = 0x20000, scoped, tag = 'input window, operand 3, single buffered']
    #allocation8 [shape = 'u8[131072]{0}', space=vmem, size = 0x20000, scoped, tag = 'input window, operand 5, single buffered']
    #allocation9 [shape = 's32[1]{0}', space=sflag, size = 0x4, scoped, tag = 'scoped memory for tpu_custom_call.1']
    #allocation10 [shape = 'u8[65536]{0}', space=vmem, size = 0x10000, scoped, tag = 'input window, operand 7, single buffered']
    #allocation11 [shape = 'u8[4096]{0}', space=vmem, size = 0x1000, scoped, tag = 'output window, operand 0, single buffered']
    %14 = vsyncpa [#allocation3], 0
    %15 = vsyncpa [#allocation6], 0
    %16 = vsyncpa [#allocation9], 0
    %17 = vsyncpa [#allocation4], 0
    // Predicated region
    $region2: #{tpu_custom_call.1} parent=1 // pred_check
      _
    $region3: #{tpu_custom_call.1} parent=1 // pred_check_branch
      %19 = sbr.rel (0) target = $region5
    $region4: #{tpu_custom_call.1} parent=1 // pred_region
      %s21 = ssub.s32 128, 128
      %22 = vsyncadd [#allocation3], %s21
      %s24 = sshll.u32 [#allocation2], 4
      %s25 = int_to_ptr.vmem [resolvable:$true] %s24
      %27 = dma.hbm_to_vmem [thread:$0]  %s0, 128, %s25, [#allocation3]
    $region5: #{tpu_custom_call.1} parent=1 // pred_fallthru
      _
    // Predicated region
    $region6: #{tpu_custom_call.1} parent=1 // pred_check
      _
    $region7: #{tpu_custom_call.1} parent=1 // pred_check_branch
      %29 = sbr.rel (0) target = $region9
    $region8: #{tpu_custom_call.1} parent=1 // pred_region
      %s31 = ssub.s32 2048, 2048
      %32 = vsyncadd [#allocation6], %s31
      %s33 = sshll.u32 [#allocation5], 4
      %s34 = int_to_ptr.vmem [resolvable:$true] %s33
      %39 = dma.hbm_to_vmem [thread:$0]  %s1, 2048, %s34, [#allocation6], 128, 128, 8
    $region9: #{tpu_custom_call.1} parent=1 // pred_fallthru
      _
    // Predicated region
    $region10: #{tpu_custom_call.1} parent=1 // pred_check
      _
    $region11: #{tpu_custom_call.1} parent=1 // pred_check_branch
      %41 = sbr.rel (0) target = $region13
    $region12: #{tpu_custom_call.1} parent=1 // pred_region
      _
    $region13: #{tpu_custom_call.1} parent=1 // pred_fallthru
      _
    // Predicated region
    $region14: #{tpu_custom_call.1} parent=1 // pred_check
      _
    $region15: #{tpu_custom_call.1} parent=1 // pred_check_branch
      %43 = sbr.rel (0) target = $region17
    $region16: #{tpu_custom_call.1} parent=1 // pred_region
      %s45 = ssub.s32 4096, 4096
      %46 = vsyncadd [#allocation6], %s45
      %s47 = sshll.u32 [#allocation7], 4
      %s48 = int_to_ptr.vmem [resolvable:$true] %s47
      %53 = dma.hbm_to_vmem [thread:$0]  %s3, 4096, %s48, [#allocation6], 256, 256, 16
    $region17: #{tpu_custom_call.1} parent=1 // pred_fallthru
      _
    // Predicated region
    $region18: #{tpu_custom_call.1} parent=1 // pred_check
      _
    $region19: #{tpu_custom_call.1} parent=1 // pred_check_branch
      %55 = sbr.rel (0) target = $region21
    $region20: #{tpu_custom_call.1} parent=1 // pred_region
      _
    $region21: #{tpu_custom_call.1} parent=1 // pred_fallthru
      _
    // Predicated region
    $region22: #{tpu_custom_call.1} parent=1 // pred_check
      _
    $region23: #{tpu_custom_call.1} parent=1 // pred_check_branch
      %57 = sbr.rel (0) target = $region25
    $region24: #{tpu_custom_call.1} parent=1 // pred_region
      %s59 = ssub.s32 4096, 4096
      %60 = vsyncadd [#allocation9], %s59
      %s61 = sshll.u32 [#allocation8], 4
      %s62 = int_to_ptr.vmem [resolvable:$true] %s61
      %67 = dma.hbm_to_vmem [thread:$0]  %s5, 4096, %s62, [#allocation9], 128, 128, 8
    $region25: #{tpu_custom_call.1} parent=1 // pred_fallthru
      _
    // Predicated region
    $region26: #{tpu_custom_call.1} parent=1 // pred_check
      _
    $region27: #{tpu_custom_call.1} parent=1 // pred_check_branch
      %69 = sbr.rel (0) target = $region29
    $region28: #{tpu_custom_call.1} parent=1 // pred_region
      _
    $region29: #{tpu_custom_call.1} parent=1 // pred_fallthru
      _
    // Predicated region
    $region30: #{tpu_custom_call.1} parent=1 // pred_check
      _
    $region31: #{tpu_custom_call.1} parent=1 // pred_check_branch
      %71 = sbr.rel (0) target = $region33
    $region32: #{tpu_custom_call.1} parent=1 // pred_region
      %s73 = ssub.s32 2048, 2048
      %74 = vsyncadd [#allocation9], %s73
      %s75 = sshll.u32 [#allocation10], 4
      %s76 = int_to_ptr.vmem [resolvable:$true] %s75
      %81 = dma.hbm_to_vmem [thread:$0]  %s7, 2048, %s76, [#allocation9], 128, 128, 8
    $region33: #{tpu_custom_call.1} parent=1 // pred_fallthru
      _
    // Predicated region
    $region34: #{tpu_custom_call.1} parent=1 // pred_check
      _
    $region35: #{tpu_custom_call.1} parent=1 // pred_check_branch
      %83 = sbr.rel (0) target = $region37
    $region36: #{tpu_custom_call.1} parent=1 // pred_region
      _
    $region37: #{tpu_custom_call.1} parent=1 // pred_fallthru
      _
    // Predicated region
    $region38: #{tpu_custom_call.1} parent=1 // pred_check
      _
    $region39: #{tpu_custom_call.1} parent=1 // pred_check_branch
      %85 = sbr.rel (0) target = $region41
    $region40: #{tpu_custom_call.1} parent=1 // pred_region
      %86 = dma.done [#allocation3], 128
    $region41: #{tpu_custom_call.1} parent=1 // pred_fallthru
      _
    // Predicated region
    $region42: #{tpu_custom_call.1} parent=1 // pred_check
      _
    $region43: #{tpu_custom_call.1} parent=1 // pred_check_branch
      %88 = sbr.rel (0) target = $region45
    $region44: #{tpu_custom_call.1} parent=1 // pred_region
      %89 = dma.done [#allocation6], 2048
    $region45: #{tpu_custom_call.1} parent=1 // pred_fallthru
      _
    // Predicated region
    $region46: #{tpu_custom_call.1} parent=1 // pred_check
      _
    $region47: #{tpu_custom_call.1} parent=1 // pred_check_branch
      %91 = sbr.rel (0) target = $region49
    $region48: #{tpu_custom_call.1} parent=1 // pred_region
      %92 = dma.done [#allocation6], 4096
    $region49: #{tpu_custom_call.1} parent=1 // pred_fallthru
      _
    // Predicated region
    $region50: #{tpu_custom_call.1} parent=1 // pred_check
      _
    $region51: #{tpu_custom_call.1} parent=1 // pred_check_branch
      %94 = sbr.rel (0) target = $region53
    $region52: #{tpu_custom_call.1} parent=1 // pred_region
      %95 = dma.done [#allocation9], 4096
    $region53: #{tpu_custom_call.1} parent=1 // pred_fallthru
      _
    // Predicated region
    $region54: #{tpu_custom_call.1} parent=1 // pred_check
      _
    $region55: #{tpu_custom_call.1} parent=1 // pred_check_branch
      %97 = sbr.rel (0) target = $region57
    $region56: #{tpu_custom_call.1} parent=1 // pred_region
      %98 = dma.done [#allocation9], 2048
    $region57: #{tpu_custom_call.1} parent=1 // pred_fallthru
      _
    %v99 = vld [vmem:[#allocation2] sm:$0xff]
    %v100 = vld [vmem:[#allocation5] sm:$0xff]
    %v101 = vld [vmem:[#allocation5 + $0x8] sm:$0xff]
    %v102 = vld [vmem:[#allocation5 + $0x10] sm:$0xff]
    %v103 = vld [vmem:[#allocation5 + $0x18] sm:$0xff]
    %v104 = vld [vmem:[#allocation5 + $0x20] sm:$0xff]
    %v105 = vld [vmem:[#allocation5 + $0x28] sm:$0xff]
    %v106 = vld [vmem:[#allocation5 + $0x30] sm:$0xff]
    %v107 = vld [vmem:[#allocation5 + $0x38] sm:$0xff]
    %v108 = vld [vmem:[#allocation5 + $0x40] sm:$0xff]
    %v109 = vld [vmem:[#allocation5 + $0x48] sm:$0xff]
    %v110 = vld [vmem:[#allocation5 + $0x50] sm:$0xff]
    %v111 = vld [vmem:[#allocation5 + $0x58] sm:$0xff]
    %v112 = vld [vmem:[#allocation5 + $0x60] sm:$0xff]
    %v113 = vld [vmem:[#allocation5 + $0x68] sm:$0xff]
    %v114 = vld [vmem:[#allocation5 + $0x70] sm:$0xff]
    %v115 = vld [vmem:[#allocation5 + $0x78] sm:$0xff]
    %v116 = vld [vmem:[%s2] sm:$0x1]
    %v118 = vlaneseq
    %v119 = vshrl.u32 %v118, 7
    %v120 = vsub.s32 0, %v119
    %v121 = vrot.slane %v116, %v120
    %123 = vmatprep.subr.mxu0 0.0
    %124 = vmatpush1.msra.mxu0 %v115
    %125 = vmatprep.subr.mxu0 0.0
    %126 = vmatpush1.msra.mxu0 %v114
    %127 = vmatprep.subr.mxu0 0.0
    %128 = vmatpush1.msra.mxu0 %v113
    %129 = vmatprep.subr.mxu0 0.0
    %130 = vmatpush1.msra.mxu0 %v112
    %131 = vmatprep.subr.mxu0 0.0
    %132 = vmatpush1.msra.mxu0 %v111
    %133 = vmatprep.subr.mxu0 0.0
    %134 = vmatpush1.msra.mxu0 %v110
    %135 = vmatprep.subr.mxu0 0.0
    %136 = vmatpush1.msra.mxu0 %v109
    %137 = vmatprep.subr.mxu0 0.0
    %138 = vmatpush1.msra.mxu0 %v108
    %139 = vmatprep.subr.mxu0 0.0
    %140 = vmatpush1.msra.mxu0 %v107
    %141 = vmatprep.subr.mxu0 0.0
    %142 = vmatpush1.msra.mxu0 %v106
    %143 = vmatprep.subr.mxu0 0.0
    %144 = vmatpush1.msra.mxu0 %v105
    %145 = vmatprep.subr.mxu0 0.0
    %146 = vmatpush1.msra.mxu0 %v104
    %147 = vmatprep.subr.mxu0 0.0
    %148 = vmatpush1.msra.mxu0 %v103
    %149 = vmatprep.subr.mxu0 0.0
    %150 = vmatpush1.msra.mxu0 %v102
    %151 = vmatprep.subr.mxu0 0.0
    %152 = vmatpush1.msra.mxu0 %v101
    %153 = vmatprep.subr.mxu0 0.0
    %154 = vmatpush1.msra.mxu0 %v100
    %155 = vmatprep.subr.mxu0 0.0
    %156 = vmatpush2.msra.mxu0 0.0
    %157 = vmatprep.subr.mxu0 0.0
    %158 = vmatpush2.msra.mxu0 0.0
    %159 = vmatprep.subr.mxu0 0.0
    %160 = vmatpush2.msra.mxu0 0.0
    %161 = vmatprep.subr.mxu0 0.0
    %162 = vmatpush2.msra.mxu0 0.0
    %163 = vmatprep.subr.mxu0 0.0
    %164 = vmatpush2.msra.mxu0 0.0
    %165 = vmatprep.subr.mxu0 0.0
    %166 = vmatpush2.msra.mxu0 0.0
    %167 = vmatprep.subr.mxu0 0.0
    %168 = vmatpush2.msra.mxu0 0.0
    %169 = vmatprep.subr.mxu0 0.0
    %170 = vmatpush2.msra.mxu0 0.0
    %171 = vmatprep.subr.mxu0 0.0
    %172 = vmatpush2.msra.mxu0 0.0
    %173 = vmatprep.subr.mxu0 0.0
    %174 = vmatpush2.msra.mxu0 0.0
    %175 = vmatprep.subr.mxu0 0.0
    %176 = vmatpush2.msra.mxu0 0.0
    %177 = vmatprep.subr.mxu0 0.0
    %178 = vmatpush2.msra.mxu0 0.0
    %179 = vmatprep.subr.mxu0 0.0
    %180 = vmatpush2.msra.mxu0 0.0
    %181 = vmatprep.subr.mxu0 0.0
    %182 = vmatpush2.msra.mxu0 0.0
    %183 = vmatprep.subr.mxu0 0.0
    %184 = vmatpush2.msra.mxu0 0.0
    %185 = vmatprep.subr.mxu0 0.0
    %186 = vmatpush2.msra.mxu0 0.0
    %187 = vmatprep.mubr.f32.mxu0 0.0
    %188 = vmatmul.mubr.f32.gmra.mxu0 %v99
    %v189 = vpop.f32.mrf.mxu0
    %v190 = vadd.f32 %v121, %v189
    %v191 = vpop.f32.mrf.mxu0
    %192 = vdwg.mxu0
    %v193 = vmax.f32 %v190, 0.0
    %v194 = vld [vmem:[#allocation7] sm:$0xff]
    %v195 = vld [vmem:[#allocation7 + $0x8] sm:$0xff]
    %v196 = vld [vmem:[#allocation7 + $0x10] sm:$0xff]
    %v197 = vld [vmem:[#allocation7 + $0x18] sm:$0xff]
    %v198 = vld [vmem:[#allocation7 + $0x20] sm:$0xff]
    %v199 = vld [vmem:[#allocation7 + $0x28] sm:$0xff]
    %v200 = vld [vmem:[#allocation7 + $0x30] sm:$0xff]
    %v201 = vld [vmem:[#allocation7 + $0x38] sm:$0xff]
    %v202 = vld [vmem:[#allocation7 + $0x40] sm:$0xff]
    %v203 = vld [vmem:[#allocation7 + $0x48] sm:$0xff]
    %v204 = vld [vmem:[#allocation7 + $0x50] sm:$0xff]
    %v205 = vld [vmem:[#allocation7 + $0x58] sm:$0xff]
    %v206 = vld [vmem:[#allocation7 + $0x60] sm:$0xff]
    %v207 = vld [vmem:[#allocation7 + $0x68] sm:$0xff]
    %v208 = vld [vmem:[#allocation7 + $0x70] sm:$0xff]
    %v209 = vld [vmem:[#allocation7 + $0x78] sm:$0xff]
    %v210 = vld [vmem:[#allocation7 + $0x80] sm:$0xff]
    %v211 = vld [vmem:[#allocation7 + $0x88] sm:$0xff]
    %v212 = vld [vmem:[#allocation7 + $0x90] sm:$0xff]
    %v213 = vld [vmem:[#allocation7 + $0x98] sm:$0xff]
    %v214 = vld [vmem:[#allocation7 + $0xa0] sm:$0xff]
    %v215 = vld [vmem:[#allocation7 + $0xa8] sm:$0xff]
    %v216 = vld [vmem:[#allocation7 + $0xb0] sm:$0xff]
    %v217 = vld [vmem:[#allocation7 + $0xb8] sm:$0xff]
    %v218 = vld [vmem:[#allocation7 + $0xc0] sm:$0xff]
    %v219 = vld [vmem:[#allocation7 + $0xc8] sm:$0xff]
    %v220 = vld [vmem:[#allocation7 + $0xd0] sm:$0xff]
    %v221 = vld [vmem:[#allocation7 + $0xd8] sm:$0xff]
    %v222 = vld [vmem:[#allocation7 + $0xe0] sm:$0xff]
    %v223 = vld [vmem:[#allocation7 + $0xe8] sm:$0xff]
    %v224 = vld [vmem:[#allocation7 + $0xf0] sm:$0xff]
    %v225 = vld [vmem:[#allocation7 + $0xf8] sm:$0xff]
    %v226 = vld [vmem:[%s4] sm:$0x3]
    %v228 = vlaneseq
    %v229 = vshrl.u32 %v228, 7
    %v230 = vsub.s32 0, %v229
    %v231 = vrot.slane %v226, %v230
    %v232 = vlaneseq
    %v233 = vshrl.u32 %v232, 7
    %v234 = vsub.s32 1, %v233
    %v235 = vrot.slane %v226, %v234
    %238 = vmatprep.subr.mxu0 %v225
    %239 = vmatpush1.msra.mxu0 %v224
    %240 = vmatprep.subr.mxu0 %v223
    %241 = vmatpush1.msra.mxu0 %v222
    %242 = vmatprep.subr.mxu0 %v221
    %243 = vmatpush1.msra.mxu0 %v220
    %244 = vmatprep.subr.mxu0 %v219
    %245 = vmatpush1.msra.mxu0 %v218
    %246 = vmatprep.subr.mxu0 %v217
    %247 = vmatpush1.msra.mxu0 %v216
    %248 = vmatprep.subr.mxu0 %v215
    %249 = vmatpush1.msra.mxu0 %v214
    %250 = vmatprep.subr.mxu0 %v213
    %251 = vmatpush1.msra.mxu0 %v212
    %252 = vmatprep.subr.mxu0 %v211
    %253 = vmatpush1.msra.mxu0 %v210
    %254 = vmatprep.subr.mxu0 %v209
    %255 = vmatpush1.msra.mxu0 %v208
    %256 = vmatprep.subr.mxu0 %v207
    %257 = vmatpush1.msra.mxu0 %v206
    %258 = vmatprep.subr.mxu0 %v205
    %259 = vmatpush1.msra.mxu0 %v204
    %260 = vmatprep.subr.mxu0 %v203
    %261 = vmatpush1.msra.mxu0 %v202
    %262 = vmatprep.subr.mxu0 %v201
    %263 = vmatpush1.msra.mxu0 %v200
    %264 = vmatprep.subr.mxu0 %v199
    %265 = vmatpush1.msra.mxu0 %v198
    %266 = vmatprep.subr.mxu0 %v197
    %267 = vmatpush1.msra.mxu0 %v196
    %268 = vmatprep.subr.mxu0 %v195
    %269 = vmatpush1.msra.mxu0 %v194
    %270 = vmatprep.subr.mxu0 0.0
    %271 = vmatpush2.msra.mxu0 0.0
    %272 = vmatprep.subr.mxu0 0.0
    %273 = vmatpush2.msra.mxu0 0.0
    %274 = vmatprep.subr.mxu0 0.0
    %275 = vmatpush2.msra.mxu0 0.0
    %276 = vmatprep.subr.mxu0 0.0
    %277 = vmatpush2.msra.mxu0 0.0
    %278 = vmatprep.subr.mxu0 0.0
    %279 = vmatpush2.msra.mxu0 0.0
    %280 = vmatprep.subr.mxu0 0.0
    %281 = vmatpush2.msra.mxu0 0.0
    %282 = vmatprep.subr.mxu0 0.0
    %283 = vmatpush2.msra.mxu0 0.0
    %284 = vmatprep.subr.mxu0 0.0
    %285 = vmatpush2.msra.mxu0 0.0
    %286 = vmatprep.subr.mxu0 0.0
    %287 = vmatpush2.msra.mxu0 0.0
    %288 = vmatprep.subr.mxu0 0.0
    %289 = vmatpush2.msra.mxu0 0.0
    %290 = vmatprep.subr.mxu0 0.0
    %291 = vmatpush2.msra.mxu0 0.0
    %292 = vmatprep.subr.mxu0 0.0
    %293 = vmatpush2.msra.mxu0 0.0
    %294 = vmatprep.subr.mxu0 0.0
    %295 = vmatpush2.msra.mxu0 0.0
    %296 = vmatprep.subr.mxu0 0.0
    %297 = vmatpush2.msra.mxu0 0.0
    %298 = vmatprep.subr.mxu0 0.0
    %299 = vmatpush2.msra.mxu0 0.0
    %300 = vmatprep.subr.mxu0 0.0
    %301 = vmatpush2.msra.mxu0 0.0
    %302 = vmatprep.mubr.f32.mxu0 0.0
    %303 = vmatmul.mubr.f32.gmra.mxu0 %v193
    %v304 = vpop.f32.mrf.mxu0
    %v305 = vadd.f32 %v231, %v304
    %v306 = vpop.f32.mrf.mxu0
    %v307 = vadd.f32 %v235, %v306
    %308 = vdwg.mxu0
    %v309 = vmax.f32 %v305, 0.0
    %v310 = vmax.f32 %v307, 0.0
    %v311 = vld [vmem:[#allocation8] sm:$0xff]
    %v312 = vld [vmem:[#allocation8 + $0x8] sm:$0xff]
    %v313 = vld [vmem:[#allocation8 + $0x10] sm:$0xff]
    %v314 = vld [vmem:[#allocation8 + $0x18] sm:$0xff]
    %v315 = vld [vmem:[#allocation8 + $0x20] sm:$0xff]
    %v316 = vld [vmem:[#allocation8 + $0x28] sm:$0xff]
    %v317 = vld [vmem:[#allocation8 + $0x30] sm:$0xff]
    %v318 = vld [vmem:[#allocation8 + $0x38] sm:$0xff]
    %v319 = vld [vmem:[#allocation8 + $0x40] sm:$0xff]
    %v320 = vld [vmem:[#allocation8 + $0x48] sm:$0xff]
    %v321 = vld [vmem:[#allocation8 + $0x50] sm:$0xff]
    %v322 = vld [vmem:[#allocation8 + $0x58] sm:$0xff]
    %v323 = vld [vmem:[#allocation8 + $0x60] sm:$0xff]
    %v324 = vld [vmem:[#allocation8 + $0x68] sm:$0xff]
    %v325 = vld [vmem:[#allocation8 + $0x70] sm:$0xff]
    %v326 = vld [vmem:[#allocation8 + $0x78] sm:$0xff]
    %v327 = vld [vmem:[#allocation8 + $0x80] sm:$0xff]
    %v328 = vld [vmem:[#allocation8 + $0x88] sm:$0xff]
    %v329 = vld [vmem:[#allocation8 + $0x90] sm:$0xff]
    %v330 = vld [vmem:[#allocation8 + $0x98] sm:$0xff]
    %v331 = vld [vmem:[#allocation8 + $0xa0] sm:$0xff]
    %v332 = vld [vmem:[#allocation8 + $0xa8] sm:$0xff]
    %v333 = vld [vmem:[#allocation8 + $0xb0] sm:$0xff]
    %v334 = vld [vmem:[#allocation8 + $0xb8] sm:$0xff]
    %v335 = vld [vmem:[#allocation8 + $0xc0] sm:$0xff]
    %v336 = vld [vmem:[#allocation8 + $0xc8] sm:$0xff]
    %v337 = vld [vmem:[#allocation8 + $0xd0] sm:$0xff]
    %v338 = vld [vmem:[#allocation8 + $0xd8] sm:$0xff]
    %v339 = vld [vmem:[#allocation8 + $0xe0] sm:$0xff]
    %v340 = vld [vmem:[#allocation8 + $0xe8] sm:$0xff]
    %v341 = vld [vmem:[#allocation8 + $0xf0] sm:$0xff]
    %v342 = vld [vmem:[#allocation8 + $0xf8] sm:$0xff]
    %v343 = vld [vmem:[%s6] sm:$0x1]
    %v345 = vlaneseq
    %v346 = vshrl.u32 %v345, 7
    %v347 = vsub.s32 0, %v346
    %v348 = vrot.slane %v343, %v347
    %350 = vmatprep.subr.mxu0 0.0
    %351 = vmatpush1.msra.mxu0 %v326
    %352 = vmatprep.subr.mxu0 0.0
    %353 = vmatpush1.msra.mxu0 %v325
    %354 = vmatprep.subr.mxu0 0.0
    %355 = vmatpush1.msra.mxu0 %v324
    %356 = vmatprep.subr.mxu0 0.0
    %357 = vmatpush1.msra.mxu0 %v323
    %358 = vmatprep.subr.mxu0 0.0
    %359 = vmatpush1.msra.mxu0 %v322
    %360 = vmatprep.subr.mxu0 0.0
    %361 = vmatpush1.msra.mxu0 %v321
    %362 = vmatprep.subr.mxu0 0.0
    %363 = vmatpush1.msra.mxu0 %v320
    %364 = vmatprep.subr.mxu0 0.0
    %365 = vmatpush1.msra.mxu0 %v319
    %366 = vmatprep.subr.mxu0 0.0
    %367 = vmatpush1.msra.mxu0 %v318
    %368 = vmatprep.subr.mxu0 0.0
    %369 = vmatpush1.msra.mxu0 %v317
    %370 = vmatprep.subr.mxu0 0.0
    %371 = vmatpush1.msra.mxu0 %v316
    %372 = vmatprep.subr.mxu0 0.0
    %373 = vmatpush1.msra.mxu0 %v315
    %374 = vmatprep.subr.mxu0 0.0
    %375 = vmatpush1.msra.mxu0 %v314
    %376 = vmatprep.subr.mxu0 0.0
    %377 = vmatpush1.msra.mxu0 %v313
    %378 = vmatprep.subr.mxu0 0.0
    %379 = vmatpush1.msra.mxu0 %v312
    %380 = vmatprep.subr.mxu0 0.0
    %381 = vmatpush1.msra.mxu0 %v311
    %382 = vmatprep.subr.mxu0 0.0
    %383 = vmatpush2.msra.mxu0 %v342
    %384 = vmatprep.subr.mxu0 0.0
    %385 = vmatpush2.msra.mxu0 %v341
    %386 = vmatprep.subr.mxu0 0.0
    %387 = vmatpush2.msra.mxu0 %v340
    %388 = vmatprep.subr.mxu0 0.0
    %389 = vmatpush2.msra.mxu0 %v339
    %390 = vmatprep.subr.mxu0 0.0
    %391 = vmatpush2.msra.mxu0 %v338
    %392 = vmatprep.subr.mxu0 0.0
    %393 = vmatpush2.msra.mxu0 %v337
    %394 = vmatprep.subr.mxu0 0.0
    %395 = vmatpush2.msra.mxu0 %v336
    %396 = vmatprep.subr.mxu0 0.0
    %397 = vmatpush2.msra.mxu0 %v335
    %398 = vmatprep.subr.mxu0 0.0
    %399 = vmatpush2.msra.mxu0 %v334
    %400 = vmatprep.subr.mxu0 0.0
    %401 = vmatpush2.msra.mxu0 %v333
    %402 = vmatprep.subr.mxu0 0.0
    %403 = vmatpush2.msra.mxu0 %v332
    %404 = vmatprep.subr.mxu0 0.0
    %405 = vmatpush2.msra.mxu0 %v331
    %406 = vmatprep.subr.mxu0 0.0
    %407 = vmatpush2.msra.mxu0 %v330
    %408 = vmatprep.subr.mxu0 0.0
    %409 = vmatpush2.msra.mxu0 %v329
    %410 = vmatprep.subr.mxu0 0.0
    %411 = vmatpush2.msra.mxu0 %v328
    %412 = vmatprep.subr.mxu0 0.0
    %413 = vmatpush2.msra.mxu0 %v327
    %414 = vmatprep.mubr.f32.mxu0 %v310
    %415 = vmatmul.mubr.f32.gmra.mxu0 %v309
    %v416 = vpop.f32.mrf.mxu0
    %v417 = vadd.f32 %v348, %v416
    %v418 = vpop.f32.mrf.mxu0
    %419 = vdwg.mxu0
    %v420 = vmax.f32 %v417, 0.0
    %v421 = vld [vmem:[#allocation10] sm:$0xff]
    %v422 = vld [vmem:[#allocation10 + $0x8] sm:$0xff]
    %v423 = vld [vmem:[#allocation10 + $0x10] sm:$0xff]
    %v424 = vld [vmem:[#allocation10 + $0x18] sm:$0xff]
    %v425 = vld [vmem:[#allocation10 + $0x20] sm:$0xff]
    %v426 = vld [vmem:[#allocation10 + $0x28] sm:$0xff]
    %v427 = vld [vmem:[#allocation10 + $0x30] sm:$0xff]
    %v428 = vld [vmem:[#allocation10 + $0x38] sm:$0xff]
    %v429 = vld [vmem:[#allocation10 + $0x40] sm:$0xff]
    %v430 = vld [vmem:[#allocation10 + $0x48] sm:$0xff]
    %v431 = vld [vmem:[#allocation10 + $0x50] sm:$0xff]
    %v432 = vld [vmem:[#allocation10 + $0x58] sm:$0xff]
    %v433 = vld [vmem:[#allocation10 + $0x60] sm:$0xff]
    %v434 = vld [vmem:[#allocation10 + $0x68] sm:$0xff]
    %v435 = vld [vmem:[#allocation10 + $0x70] sm:$0xff]
    %v436 = vld [vmem:[#allocation10 + $0x78] sm:$0xff]
    %v437 = vld [vmem:[%s8] sm:$0x1]
    %v439 = vlaneseq
    %v440 = vshrl.u32 %v439, 7
    %v441 = vsub.s32 0, %v440
    %v442 = vrot.slane %v437, %v441
    %444 = vmatprep.subr.mxu0 0.0
    %445 = vmatpush1.msra.mxu0 %v436
    %446 = vmatprep.subr.mxu0 0.0
    %447 = vmatpush1.msra.mxu0 %v435
    %448 = vmatprep.subr.mxu0 0.0
    %449 = vmatpush1.msra.mxu0 %v434
    %450 = vmatprep.subr.mxu0 0.0
    %451 = vmatpush1.msra.mxu0 %v433
    %452 = vmatprep.subr.mxu0 0.0
    %453 = vmatpush1.msra.mxu0 %v432
    %454 = vmatprep.subr.mxu0 0.0
    %455 = vmatpush1.msra.mxu0 %v431
    %456 = vmatprep.subr.mxu0 0.0
    %457 = vmatpush1.msra.mxu0 %v430
    %458 = vmatprep.subr.mxu0 0.0
    %459 = vmatpush1.msra.mxu0 %v429
    %460 = vmatprep.subr.mxu0 0.0
    %461 = vmatpush1.msra.mxu0 %v428
    %462 = vmatprep.subr.mxu0 0.0
    %463 = vmatpush1.msra.mxu0 %v427
    %464 = vmatprep.subr.mxu0 0.0
    %465 = vmatpush1.msra.mxu0 %v426
    %466 = vmatprep.subr.mxu0 0.0
    %467 = vmatpush1.msra.mxu0 %v425
    %468 = vmatprep.subr.mxu0 0.0
    %469 = vmatpush1.msra.mxu0 %v424
    %470 = vmatprep.subr.mxu0 0.0
    %471 = vmatpush1.msra.mxu0 %v423
    %472 = vmatprep.subr.mxu0 0.0
    %473 = vmatpush1.msra.mxu0 %v422
    %474 = vmatprep.subr.mxu0 0.0
    %475 = vmatpush1.msra.mxu0 %v421
    %476 = vmatprep.subr.mxu0 0.0
    %477 = vmatpush2.msra.mxu0 0.0
    %478 = vmatprep.subr.mxu0 0.0
    %479 = vmatpush2.msra.mxu0 0.0
    %480 = vmatprep.subr.mxu0 0.0
    %481 = vmatpush2.msra.mxu0 0.0
    %482 = vmatprep.subr.mxu0 0.0
    %483 = vmatpush2.msra.mxu0 0.0
    %484 = vmatprep.subr.mxu0 0.0
    %485 = vmatpush2.msra.mxu0 0.0
    %486 = vmatprep.subr.mxu0 0.0
    %487 = vmatpush2.msra.mxu0 0.0
    %488 = vmatprep.subr.mxu0 0.0
    %489 = vmatpush2.msra.mxu0 0.0
    %490 = vmatprep.subr.mxu0 0.0
    %491 = vmatpush2.msra.mxu0 0.0
    %492 = vmatprep.subr.mxu0 0.0
    %493 = vmatpush2.msra.mxu0 0.0
    %494 = vmatprep.subr.mxu0 0.0
    %495 = vmatpush2.msra.mxu0 0.0
    %496 = vmatprep.subr.mxu0 0.0
    %497 = vmatpush2.msra.mxu0 0.0
    %498 = vmatprep.subr.mxu0 0.0
    %499 = vmatpush2.msra.mxu0 0.0
    %500 = vmatprep.subr.mxu0 0.0
    %501 = vmatpush2.msra.mxu0 0.0
    %502 = vmatprep.subr.mxu0 0.0
    %503 = vmatpush2.msra.mxu0 0.0
    %504 = vmatprep.subr.mxu0 0.0
    %505 = vmatpush2.msra.mxu0 0.0
    %506 = vmatprep.subr.mxu0 0.0
    %507 = vmatpush2.msra.mxu0 0.0
    %508 = vmatprep.mubr.f32.mxu0 0.0
    %509 = vmatmul.mubr.f32.gmra.mxu0 %v420
    %v510 = vpop.f32.mrf.mxu0
    %v511 = vadd.f32 %v442, %v510
    %v512 = vpop.f32.mrf.mxu0
    %513 = vdwg.mxu0
    %514 = vst [vmem:[#allocation11] sm:$0xff] %v511
    // Predicated region
    $region58: #{tpu_custom_call.1} parent=1 // pred_check
      _
    $region59: #{tpu_custom_call.1} parent=1 // pred_check_branch
      %516 = sbr.rel (0) target = $region61
    $region60: #{tpu_custom_call.1} parent=1 // pred_region
      %s518 = ssub.s32 128, 128
      %519 = vsyncadd [#allocation4], %s518
      %s521 = sshll.u32 [#allocation11], 4
      %s522 = int_to_ptr.vmem [resolvable:$true] %s521
      %524 = dma.vmem_to_hbm [thread:$0]  %s522, 128, %s9, [#allocation4]
    $region61: #{tpu_custom_call.1} parent=1 // pred_fallthru
      _
    // Predicated region
    $region62: #{tpu_custom_call.1} parent=1 // pred_check
      _
    $region63: #{tpu_custom_call.1} parent=1 // pred_check_branch
      %526 = sbr.rel (0) target = $region65
    $region64: #{tpu_custom_call.1} parent=1 // pred_region
      %527 = dma.done [#allocation4], 128
    $region65: #{tpu_custom_call.1} parent=1 // pred_fallthru
      _
    %528 = vsyncpa [#allocation3], 1
    %529 = vsyncpa [#allocation6], 1
    %530 = vsyncpa [#allocation9], 1
    %531 = vsyncpa [#allocation4], 1

</llo_original>
